<compile_context>
chip_gen: v5e
topology: v5e:2x2
jax: 0.10.0
libtpu: 0.0.40
codegen_flags: <defaults>
</compile_context>

<pallas_src>
import functools

import jax
import jax.numpy as jnp
from jax.experimental import pallas as pl
from jax.experimental.pallas import tpu as pltpu

INPUT_SIZE = 27
HIDDEN = 128
POLICY_OUT = 4
VALUE_OUT = 1
IN_PAD = 32        # fc1 K padded 27 -> 32 (zero rows, numerically free)
HEAD_PAD = 8       # fused policy(4) + value(1) head padded to 8 lanes


def _round_up(n, m):
    return (n + m - 1) // m * m


# ----------------------------------------------------------------------------
# Kernel
# ----------------------------------------------------------------------------
def agent_nn_kernel(x_ref, w1_ref, b1_ref, w2_ref, b2_ref, wh_ref, bh_ref,
                    out_ref):
    """fc1 -> relu -> fc2 -> relu -> fused {policy, value} head.

    Matmul operands are bf16; accumulation + bias + ReLU in f32.
    """
    x = x_ref[...]                                        # (TILE_B, IN_PAD) bf16

    h1 = jnp.dot(x, w1_ref[...], preferred_element_type=jnp.float32) + b1_ref[...]
    h1 = jnp.maximum(h1, 0.0).astype(jnp.bfloat16)        # (TILE_B, 128)

    h2 = jnp.dot(h1, w2_ref[...], preferred_element_type=jnp.float32) + b2_ref[...]
    h2 = jnp.maximum(h2, 0.0).astype(jnp.bfloat16)        # (TILE_B, 128)

    # Fused policy+value head: (TILE_B, 128) @ (128, 8) + (1, 8)
    out_ref[...] = (
        jnp.dot(h2, wh_ref[...], preferred_element_type=jnp.float32) + bh_ref[...]
    )


# ----------------------------------------------------------------------------
# Param packing: pad fc1 K, fuse heads, cast matmul weights to bf16 (once).
# ----------------------------------------------------------------------------
def pack_params(params):
    w1, b1, w2, b2, wp, bp, wv, bv = params

    w1p = jnp.zeros((IN_PAD, HIDDEN), jnp.float32).at[:INPUT_SIZE].set(w1)

    wh = jnp.zeros((HIDDEN, HEAD_PAD), jnp.float32)
    wh = wh.at[:, :POLICY_OUT].set(wp)
    wh = wh.at[:, POLICY_OUT:POLICY_OUT + VALUE_OUT].set(wv)

    bh = jnp.zeros((1, HEAD_PAD), jnp.float32)
    bh = bh.at[:, :POLICY_OUT].set(bp)
    bh = bh.at[:, POLICY_OUT:POLICY_OUT + VALUE_OUT].set(bv)

    return (w1p.astype(jnp.bfloat16), b1,
            w2.astype(jnp.bfloat16), b2,
            wh.astype(jnp.bfloat16), bh)


# ----------------------------------------------------------------------------
# Forward wrapper: batch grid, weights resident across tiles.
# ----------------------------------------------------------------------------
@functools.partial(jax.jit, static_argnames=("tile_b",))
def agent_nn_forward(x, packed, tile_b=256):
    w1, b1, w2, b2, wh, bh = packed
    batch = x.shape[0]

    tb = min(tile_b, _round_up(batch, 8))       # small batches -> single tile
    b_pad = _round_up(batch, tb)

    xb = x.astype(jnp.bfloat16)
    xb = jnp.pad(xb, ((0, b_pad - batch), (0, IN_PAD - x.shape[1])))

    grid = (b_pad // tb,)

    out = pl.pallas_call(
        agent_nn_kernel,
        out_shape=jax.ShapeDtypeStruct((b_pad, HEAD_PAD), jnp.float32),
        grid_spec=pltpu.PrefetchScalarGridSpec(
            num_scalar_prefetch=0,
            grid=grid,
            in_specs=[
                pl.BlockSpec((tb, IN_PAD), lambda i: (i, 0)),       # x tile
                pl.BlockSpec((IN_PAD, HIDDEN), lambda i: (0, 0)),   # w1 (resident)
                pl.BlockSpec((1, HIDDEN), lambda i: (0, 0)),        # b1
                pl.BlockSpec((HIDDEN, HIDDEN), lambda i: (0, 0)),   # w2 (resident)
                pl.BlockSpec((1, HIDDEN), lambda i: (0, 0)),        # b2
                pl.BlockSpec((HIDDEN, HEAD_PAD), lambda i: (0, 0)), # fused head W
                pl.BlockSpec((1, HEAD_PAD), lambda i: (0, 0)),      # fused head b
            ],
            out_specs=pl.BlockSpec((tb, HEAD_PAD), lambda i: (i, 0)),
        ),
        compiler_params=pltpu.CompilerParams(
            dimension_semantics=("parallel",),      # shards across v7x's 2 TCs
            vmem_limit_bytes=64 * 1024 * 1024,
        ),
    )(xb, w1, b1, w2, b2, wh, bh)

    policy = out[:batch, :POLICY_OUT]
    value = out[:batch, POLICY_OUT:POLICY_OUT + VALUE_OUT]
    return policy, value


# ----------------------------------------------------------------------------
# Init (mimics PyTorch nn.Linear default U(-1/sqrt(fan_in), 1/sqrt(fan_in)))
# ----------------------------------------------------------------------------
def init_linear(key, fan_in, fan_out):
    kw, kb = jax.random.split(key)
    bound = 1.0 / jnp.sqrt(jnp.float32(fan_in))
    w = jax.random.uniform(kw, (fan_in, fan_out), jnp.float32, -bound, bound)
    b = jax.random.uniform(kb, (1, fan_out), jnp.float32, -bound, bound)
    return w, b


def make_params(key, input_size=INPUT_SIZE, hidden_size1=HIDDEN,
                output_size=POLICY_OUT):
    k1, k2, k3, k4 = jax.random.split(key, 4)
    w1, b1 = init_linear(k1, input_size, hidden_size1)     # fc1
    w2, b2 = init_linear(k2, hidden_size1, hidden_size1)   # fc2
    wp, bp = init_linear(k3, hidden_size1, output_size)    # fc_policy
    wv, bv = init_linear(k4, hidden_size1, 1)              # fc_value
    return (w1, b1, w2, b2, wp, bp, wv, bv)


# ----------------------------------------------------------------------------
# References
# ----------------------------------------------------------------------------
def reference_forward_bf16(x, params):
    """Same precision path as the kernel (bf16 matmuls, f32 accumulation)."""
    w1, b1, w2, b2, wp, bp, wv, bv = params
    h1 = jnp.maximum(
        jnp.dot(x.astype(jnp.bfloat16), w1.astype(jnp.bfloat16),
                preferred_element_type=jnp.float32) + b1, 0.0)
    h2 = jnp.maximum(
        jnp.dot(h1.astype(jnp.bfloat16), w2.astype(jnp.bfloat16),
                preferred_element_type=jnp.float32) + b2, 0.0)
    h2b = h2.astype(jnp.bfloat16)
    pol = jnp.dot(h2b, wp.astype(jnp.bfloat16),
                  preferred_element_type=jnp.float32) + bp
    val = jnp.dot(h2b, wv.astype(jnp.bfloat16),
                  preferred_element_type=jnp.float32) + bv
    return pol, val


def reference_forward_f32(x, params):
    """Pure-f32 reference of the original PyTorch forward."""
    w1, b1, w2, b2, wp, bp, wv, bv = params
    h1 = jnp.maximum(x @ w1 + b1, 0.0)
    h2 = jnp.maximum(h1 @ w2 + b2, 0.0)
    return h2 @ wp + bp, h2 @ wv + bv


# ----------------------------------------------------------------------------
# Self-test
# ----------------------------------------------------------------------------
if __name__ == "__main__":
    key = jax.random.PRNGKey(0)
    k_params, k_x1, k_x2 = jax.random.split(key, 3)

    params = make_params(k_params)
    packed = pack_params(params)

    # 1) tiny batch (single-tile grid)
    x_small = jax.random.normal(k_x1, (8, INPUT_SIZE), jnp.float32)
    pol_s, val_s = agent_nn_forward(x_small, packed)
    jax.block_until_ready((pol_s, val_s))

    # 2) batch not a multiple of the tile (multi-tile grid + batch padding path)
    x_big = jax.random.normal(k_x2, (200, INPUT_SIZE), jnp.float32)
    pol_b, val_b = agent_nn_forward(x_big, packed, tile_b=64)
    jax.block_until_ready((pol_b, val_b))

    for x, pol, val in ((x_small, pol_s, val_s), (x_big, pol_b, val_b)):
        assert pol.shape == (x.shape[0], POLICY_OUT)
        assert val.shape == (x.shape[0], VALUE_OUT)

        ref_pol, ref_val = reference_forward_bf16(x, params)
        assert jnp.allclose(pol, ref_pol, atol=5e-3, rtol=5e-3)
        assert jnp.allclose(val, ref_val, atol=5e-3, rtol=5e-3)

        f32_pol, f32_val = reference_forward_f32(x, params)
        assert jnp.allclose(pol, f32_pol, atol=0.1, rtol=0.1)
        assert jnp.allclose(val, f32_val, atol=0.1, rtol=0.1)

    print("KERNEL_OK")
</pallas_src>

<mosaic_0001>
module attributes {stable_mosaic.version = 11 : i64} {
  func.func @agent_nn_kernel(%arg0: i32, %arg1: memref<8x32xbf16, #tpu.memory_space<vmem>>, %arg2: memref<32x128xbf16, #tpu.memory_space<vmem>>, %arg3: memref<1x128xf32, #tpu.memory_space<vmem>>, %arg4: memref<128x128xbf16, #tpu.memory_space<vmem>>, %arg5: memref<1x128xf32, #tpu.memory_space<vmem>>, %arg6: memref<128x8xbf16, #tpu.memory_space<vmem>>, %arg7: memref<1x8xf32, #tpu.memory_space<vmem>>, %arg8: memref<8x8xf32, #tpu.memory_space<vmem>>) attributes {dimension_semantics = [#tpu.dimension_semantics<parallel>], iteration_bounds = array<i64: 1>, scalar_prefetch = 0 : i64, scratch_operands = 0 : i64, tpu.core_type = #tpu.core_type<tc>, window_params = [{transform_indices = @transform_0, window_bounds = array<i64: 8, 32>}, {pipeline_mode = #tpu.pipeline_mode<synchronous>, transform_indices = @transform_1, window_bounds = array<i64: 32, 128>}, {pipeline_mode = #tpu.pipeline_mode<synchronous>, transform_indices = @transform_2, window_bounds = array<i64: 1, 128>}, {pipeline_mode = #tpu.pipeline_mode<synchronous>, transform_indices = @transform_3, window_bounds = array<i64: 128, 128>}, {pipeline_mode = #tpu.pipeline_mode<synchronous>, transform_indices = @transform_4, window_bounds = array<i64: 1, 128>}, {pipeline_mode = #tpu.pipeline_mode<synchronous>, transform_indices = @transform_5, window_bounds = array<i64: 128, 8>}, {pipeline_mode = #tpu.pipeline_mode<synchronous>, transform_indices = @transform_6, window_bounds = array<i64: 1, 8>}, {transform_indices = @transform_7, window_bounds = array<i64: 8, 8>}]} {
    %c0 = arith.constant 0 : index
    %c0_0 = arith.constant 0 : index
    %0 = vector.load %arg1[%c0, %c0_0] : memref<8x32xbf16, #tpu.memory_space<vmem>>, vector<8x32xbf16>
    %c0_1 = arith.constant 0 : index
    %c0_2 = arith.constant 0 : index
    %1 = vector.load %arg2[%c0_1, %c0_2] : memref<32x128xbf16, #tpu.memory_space<vmem>>, vector<32x128xbf16>
    %cst = arith.constant dense<0.000000e+00> : vector<8x128xf32>
    %2 = tpu.matmul %0, %1, %cst {dimension_numbers = #tpu.dot_dimension_numbers<[1], [0], [0], [1], [0, 0, 1, 1], [], []>} : vector<8x32xbf16>, vector<32x128xbf16>, vector<8x128xf32> -> vector<8x128xf32>
    %c0_3 = arith.constant 0 : index
    %c0_4 = arith.constant 0 : index
    %3 = vector.load %arg3[%c0_3, %c0_4] : memref<1x128xf32, #tpu.memory_space<vmem>>, vector<1x128xf32>
    %4 = vector.broadcast %3 : vector<1x128xf32> to vector<8x128xf32>
    %5 = arith.addf %2, %4 : vector<8x128xf32>
    %cst_5 = arith.constant 0.000000e+00 : f32
    %6 = vector.broadcast %cst_5 : f32 to vector<8x128xf32>
    %7 = arith.maximumf %5, %6 : vector<8x128xf32>
    %8 = arith.truncf %7 : vector<8x128xf32> to vector<8x128xbf16>
    %c0_6 = arith.constant 0 : index
    %c0_7 = arith.constant 0 : index
    %9 = vector.load %arg4[%c0_6, %c0_7] : memref<128x128xbf16, #tpu.memory_space<vmem>>, vector<128x128xbf16>
    %cst_8 = arith.constant dense<0.000000e+00> : vector<8x128xf32>
    %10 = tpu.matmul %8, %9, %cst_8 {dimension_numbers = #tpu.dot_dimension_numbers<[1], [0], [0], [1], [0, 0, 1, 1], [], []>} : vector<8x128xbf16>, vector<128x128xbf16>, vector<8x128xf32> -> vector<8x128xf32>
    %c0_9 = arith.constant 0 : index
    %c0_10 = arith.constant 0 : index
    %11 = vector.load %arg5[%c0_9, %c0_10] : memref<1x128xf32, #tpu.memory_space<vmem>>, vector<1x128xf32>
    %12 = vector.broadcast %11 : vector<1x128xf32> to vector<8x128xf32>
    %13 = arith.addf %10, %12 : vector<8x128xf32>
    %cst_11 = arith.constant 0.000000e+00 : f32
    %14 = vector.broadcast %cst_11 : f32 to vector<8x128xf32>
    %15 = arith.maximumf %13, %14 : vector<8x128xf32>
    %16 = arith.truncf %15 : vector<8x128xf32> to vector<8x128xbf16>
    %c0_12 = arith.constant 0 : index
    %c0_13 = arith.constant 0 : index
    %17 = vector.load %arg6[%c0_12, %c0_13] : memref<128x8xbf16, #tpu.memory_space<vmem>>, vector<128x8xbf16>
    %cst_14 = arith.constant dense<0.000000e+00> : vector<8x8xf32>
    %18 = tpu.matmul %16, %17, %cst_14 {dimension_numbers = #tpu.dot_dimension_numbers<[1], [0], [0], [1], [0, 0, 1, 1], [], []>} : vector<8x128xbf16>, vector<128x8xbf16>, vector<8x8xf32> -> vector<8x8xf32>
    %c0_15 = arith.constant 0 : index
    %c0_16 = arith.constant 0 : index
    %19 = vector.load %arg7[%c0_15, %c0_16] : memref<1x8xf32, #tpu.memory_space<vmem>>, vector<1x8xf32>
    %20 = vector.broadcast %19 : vector<1x8xf32> to vector<8x8xf32>
    %21 = arith.addf %18, %20 : vector<8x8xf32>
    %c0_17 = arith.constant 0 : index
    %c0_18 = arith.constant 0 : index
    %22 = vector.load %arg8[%c0_17, %c0_18] : memref<8x8xf32, #tpu.memory_space<vmem>>, vector<8x8xf32>
    tpu.vector_store %arg8[%c0_17, %c0_18], %21 {strides = array<i32>} : memref<8x8xf32, #tpu.memory_space<vmem>>, vector<8x8xf32>,
    return
  }
  func.func @transform_0(%arg0: i32) -> (i32, i32) {
    %c0_i32 = arith.constant 0 : i32
    %c0_i32_0 = arith.constant 0 : i32
    return %arg0, %c0_i32 : i32, i32
  }
  func.func @transform_1(%arg0: i32) -> (i32, i32) {
    %c0_i32 = arith.constant 0 : i32
    %c0_i32_0 = arith.constant 0 : i32
    %c0_i32_1 = arith.constant 0 : i32
    return %c0_i32, %c0_i32_0 : i32, i32
  }
  func.func @transform_2(%arg0: i32) -> (i32, i32) {
    %c0_i32 = arith.constant 0 : i32
    %c0_i32_0 = arith.constant 0 : i32
    %c0_i32_1 = arith.constant 0 : i32
    return %c0_i32, %c0_i32_0 : i32, i32
  }
  func.func @transform_3(%arg0: i32) -> (i32, i32) {
    %c0_i32 = arith.constant 0 : i32
    %c0_i32_0 = arith.constant 0 : i32
    %c0_i32_1 = arith.constant 0 : i32
    return %c0_i32, %c0_i32_0 : i32, i32
  }
  func.func @transform_4(%arg0: i32) -> (i32, i32) {
    %c0_i32 = arith.constant 0 : i32
    %c0_i32_0 = arith.constant 0 : i32
    %c0_i32_1 = arith.constant 0 : i32
    return %c0_i32, %c0_i32_0 : i32, i32
  }
  func.func @transform_5(%arg0: i32) -> (i32, i32) {
    %c0_i32 = arith.constant 0 : i32
    %c0_i32_0 = arith.constant 0 : i32
    %c0_i32_1 = arith.constant 0 : i32
    return %c0_i32, %c0_i32_0 : i32, i32
  }
  func.func @transform_6(%arg0: i32) -> (i32, i32) {
    %c0_i32 = arith.constant 0 : i32
    %c0_i32_0 = arith.constant 0 : i32
    %c0_i32_1 = arith.constant 0 : i32
    return %c0_i32, %c0_i32_0 : i32, i32
  }
  func.func @transform_7(%arg0: i32) -> (i32, i32) {
    %c0_i32 = arith.constant 0 : i32
    %c0_i32_0 = arith.constant 0 : i32
    return %arg0, %c0_i32 : i32, i32
  }
}

</mosaic_0001>

<llo_original>
// kernel: agent_nn_forward.1
$region0: #{agent_nn_forward.1}
  #allocation0 [shape = 'u32[]', space=smem, size = 0x4, offset = 0x4, fixed_abs, tag = 'smem constant byte address 0x4 - core index']
  #allocation1 [shape = 'u32[72,128]{1,0:T(1,128)}', space=vmem, size = 0x9000, scoped, tag = 'internal scratch']
  %s0 = inlined_call_operand.vmem [shape: bf16[8,32], index: 0, kind: input, shape index: {}]
  %s1 = inlined_call_operand.vmem [shape: bf16[32,128], index: 1, kind: input, shape index: {}]
  %s2 = inlined_call_operand.vmem [shape: f32[1,128], index: 2, kind: input, shape index: {}]
  %s3 = inlined_call_operand.vmem [shape: bf16[128,128], index: 3, kind: input, shape index: {}]
  %s4 = inlined_call_operand.vmem [shape: f32[1,128], index: 4, kind: input, shape index: {}]
  %s5 = inlined_call_operand.vmem [shape: bf16[128,8], index: 5, kind: input, shape index: {}]
  %s6 = inlined_call_operand.vmem [shape: f32[1,8], index: 6, kind: input, shape index: {}]
  %s7 = inlined_call_operand.vmem [shape: f32[8,8], index: 7, kind: output, shape index: {}]
  %s8 = sld [smem:[#allocation0]]
  $region38: #{agent_nn_forward.1} parent=0
    _
  %s10 = ssub.s32 1, %s8
  %s11 = scalar_select 0, %s10, %s8
  // Predicated region
  $region2: #{agent_nn_forward.1} parent=0 // pred_check
    _
  $region3: #{agent_nn_forward.1} parent=0 // pred_check_branch
    %13 = sbr.rel (0) target = $region5
  $region4: #{agent_nn_forward.1} parent=0 // pred_region
    _
  $region5: #{agent_nn_forward.1} parent=0 // pred_fallthru
    _
  // Predicated region
  $region6: #{agent_nn_forward.1} parent=0 // pred_check
    _
  $region7: #{agent_nn_forward.1} parent=0 // pred_check_branch
    %15 = sbr.rel (0) target = $region9
  $region8: #{agent_nn_forward.1} parent=0 // pred_region
    _
  $region9: #{agent_nn_forward.1} parent=0 // pred_fallthru
    _
  // Predicated region
  $region10: #{agent_nn_forward.1} parent=0 // pred_check
    _
  $region11: #{agent_nn_forward.1} parent=0 // pred_check_branch
    %17 = sbr.rel (0) target = $region13
  $region12: #{agent_nn_forward.1} parent=0 // pred_region
    _
  $region13: #{agent_nn_forward.1} parent=0 // pred_fallthru
    _
  // Predicated region
  $region14: #{agent_nn_forward.1} parent=0 // pred_check
    _
  $region15: #{agent_nn_forward.1} parent=0 // pred_check_branch
    %19 = sbr.rel (0) target = $region17
  $region16: #{agent_nn_forward.1} parent=0 // pred_region
    _
  $region17: #{agent_nn_forward.1} parent=0 // pred_fallthru
    _
  // Predicated region
  $region18: #{agent_nn_forward.1} parent=0 // pred_check
    _
  $region19: #{agent_nn_forward.1} parent=0 // pred_check_branch
    %21 = sbr.rel (0) target = $region21
  $region20: #{agent_nn_forward.1} parent=0 // pred_region
    _
  $region21: #{agent_nn_forward.1} parent=0 // pred_fallthru
    _
  // Predicated region
  $region22: #{agent_nn_forward.1} parent=0 // pred_check
    _
  $region23: #{agent_nn_forward.1} parent=0 // pred_check_branch
    %23 = sbr.rel (0) target = $region25
  $region24: #{agent_nn_forward.1} parent=0 // pred_region
    _
  $region25: #{agent_nn_forward.1} parent=0 // pred_fallthru
    _
  // Predicated region
  $region26: #{agent_nn_forward.1} parent=0 // pred_check
    _
  $region27: #{agent_nn_forward.1} parent=0 // pred_check_branch
    %25 = sbr.rel (0) target = $region29
  $region28: #{agent_nn_forward.1} parent=0 // pred_region
    _
  $region29: #{agent_nn_forward.1} parent=0 // pred_fallthru
    _
  %v27 = vld [vmem:[%s0] sm:$0xf]
  %v28 = vld [vmem:[%s1] sm:$0xf]
  %v29 = vld [vmem:[%s1 + $0x4] sm:$0xf]
  %v30 = vld [vmem:[%s1 + $0x8] sm:$0xf]
  %v31 = vld [vmem:[%s1 + $0xc] sm:$0xf]
  %v32 = vld [vmem:[%s2] sm:$0x1]
  %v34 = vperm.slane %v32, 0
  %v40 = vunpack.c.l.b16 %v28
  %v41 = vunpack.c.l.b16 %v29
  %v42 = vunpack.c.l.b16 %v30
  %v43 = vunpack.c.l.b16 %v31
  %v44 = vpack.c.b16 %v41, %v40
  %v45 = vpack.c.b16 %v43, %v42
  %vm48 = vcmask 261120
  %v50 = vsel %vm48, %v27, 0
  %52 = vmatpush.bf16.msra.mxu0 0
  %53 = vmatpush.bf16.msra.mxu0 0
  %54 = vmatpush.bf16.msra.mxu0 0
  %55 = vmatpush.bf16.msra.mxu0 0
  %56 = vmatpush.bf16.msra.mxu0 0
  %57 = vmatpush.bf16.msra.mxu0 0
  %58 = vmatpush.bf16.msra.mxu0 %v45
  %59 = vmatpush.bf16.msra.mxu0 %v44
  %60 = vmatmul.bf16.gmra.mxu0 %v50
  %v61 = vpop.f32.mrf.mxu0
  %v62 = vadd.f32 %v34, %v61
  %v63 = vpop.f32.mrf.mxu0
  %64 = vdwg.mxu0
  %v65 = vmax.f32 %v62, 0.0
  %v66 = vpack.c.bf16 %v65, %v65
  %v67 = vld [vmem:[%s3] sm:$0xf]
  %v68 = vld [vmem:[%s3 + $0x4] sm:$0xf]
  %v69 = vld [vmem:[%s3 + $0x8] sm:$0xf]
  %v70 = vld [vmem:[%s3 + $0xc] sm:$0xf]
  %v71 = vld [vmem:[%s3 + $0x10] sm:$0xf]
  %v72 = vld [vmem:[%s3 + $0x14] sm:$0xf]
  %v73 = vld [vmem:[%s3 + $0x18] sm:$0xf]
  %v74 = vld [vmem:[%s3 + $0x1c] sm:$0xf]
  %v75 = vld [vmem:[%s3 + $0x20] sm:$0xf]
  %v76 = vld [vmem:[%s3 + $0x24] sm:$0xf]
  %v77 = vld [vmem:[%s3 + $0x28] sm:$0xf]
  %v78 = vld [vmem:[%s3 + $0x2c] sm:$0xf]
  %v79 = vld [vmem:[%s3 + $0x30] sm:$0xf]
  %v80 = vld [vmem:[%s3 + $0x34] sm:$0xf]
  %v81 = vld [vmem:[%s3 + $0x38] sm:$0xf]
  %v82 = vld [vmem:[%s3 + $0x3c] sm:$0xf]
  %v83 = vld [vmem:[%s4] sm:$0x1]
  %v85 = vperm.slane %v83, 0
  %v103 = vunpack.c.l.b16 %v67
  %v104 = vunpack.c.l.b16 %v68
  %v105 = vunpack.c.l.b16 %v69
  %v106 = vunpack.c.l.b16 %v70
  %v107 = vunpack.c.l.b16 %v71
  %v108 = vunpack.c.l.b16 %v72
  %v109 = vunpack.c.l.b16 %v73
  %v110 = vunpack.c.l.b16 %v74
  %v111 = vunpack.c.l.b16 %v75
  %v112 = vunpack.c.l.b16 %v76
  %v113 = vunpack.c.l.b16 %v77
  %v114 = vunpack.c.l.b16 %v78
  %v115 = vunpack.c.l.b16 %v79
  %v116 = vunpack.c.l.b16 %v80
  %v117 = vunpack.c.l.b16 %v81
  %v118 = vunpack.c.l.b16 %v82
  %v119 = vpack.c.b16 %v104, %v103
  %v120 = vpack.c.b16 %v106, %v105
  %v121 = vpack.c.b16 %v108, %v107
  %v122 = vpack.c.b16 %v110, %v109
  %v123 = vpack.c.b16 %v112, %v111
  %v124 = vpack.c.b16 %v114, %v113
  %v125 = vpack.c.b16 %v116, %v115
  %v126 = vpack.c.b16 %v118, %v117
  %135 = vmatpush.bf16.msra.mxu0 %v126
  %136 = vmatpush.bf16.msra.mxu0 %v125
  %137 = vmatpush.bf16.msra.mxu0 %v124
  %138 = vmatpush.bf16.msra.mxu0 %v123
  %139 = vmatpush.bf16.msra.mxu0 %v122
  %140 = vmatpush.bf16.msra.mxu0 %v121
  %141 = vmatpush.bf16.msra.mxu0 %v120
  %142 = vmatpush.bf16.msra.mxu0 %v119
  %143 = vmatmul.bf16.gmra.mxu0 %v66
  %v144 = vpop.f32.mrf.mxu0
  %v145 = vadd.f32 %v85, %v144
  %v146 = vpop.f32.mrf.mxu0
  %147 = vdwg.mxu0
  %v148 = vmax.f32 %v145, 0.0
  %v149 = vpack.c.bf16 %v148, %v148
  %v150 = vld [vmem:[%s5] sm:$0xf]
  %v151 = vld [vmem:[%s5 + $0x4] sm:$0xf]
  %v152 = vld [vmem:[%s5 + $0x8] sm:$0xf]
  %v153 = vld [vmem:[%s5 + $0xc] sm:$0xf]
  %v154 = vld [vmem:[%s5 + $0x10] sm:$0xf]
  %v155 = vld [vmem:[%s5 + $0x14] sm:$0xf]
  %v156 = vld [vmem:[%s5 + $0x18] sm:$0xf]
  %v157 = vld [vmem:[%s5 + $0x1c] sm:$0xf]
  %v158 = vld [vmem:[%s5 + $0x20] sm:$0xf]
  %v159 = vld [vmem:[%s5 + $0x24] sm:$0xf]
  %v160 = vld [vmem:[%s5 + $0x28] sm:$0xf]
  %v161 = vld [vmem:[%s5 + $0x2c] sm:$0xf]
  %v162 = vld [vmem:[%s5 + $0x30] sm:$0xf]
  %v163 = vld [vmem:[%s5 + $0x34] sm:$0xf]
  %v164 = vld [vmem:[%s5 + $0x38] sm:$0xf]
  %v165 = vld [vmem:[%s5 + $0x3c] sm:$0xf]
  %v166 = vld [vmem:[%s6] sm:$0x1]
  %v168 = vperm.slane %v166, 0
  %v186 = vunpack.c.l.b16 %v150
  %v187 = vunpack.c.l.b16 %v151
  %v188 = vunpack.c.l.b16 %v152
  %v189 = vunpack.c.l.b16 %v153
  %v190 = vunpack.c.l.b16 %v154
  %v191 = vunpack.c.l.b16 %v155
  %v192 = vunpack.c.l.b16 %v156
  %v193 = vunpack.c.l.b16 %v157
  %v194 = vunpack.c.l.b16 %v158
  %v195 = vunpack.c.l.b16 %v159
  %v196 = vunpack.c.l.b16 %v160
  %v197 = vunpack.c.l.b16 %v161
  %v198 = vunpack.c.l.b16 %v162
  %v199 = vunpack.c.l.b16 %v163
  %v200 = vunpack.c.l.b16 %v164
  %v201 = vunpack.c.l.b16 %v165
  %v202 = vpack.c.b16 %v187, %v186
  %v203 = vpack.c.b16 %v189, %v188
  %v204 = vpack.c.b16 %v191, %v190
  %v205 = vpack.c.b16 %v193, %v192
  %v206 = vpack.c.b16 %v195, %v194
  %v207 = vpack.c.b16 %v197, %v196
  %v208 = vpack.c.b16 %v199, %v198
  %v209 = vpack.c.b16 %v201, %v200
  %218 = vmatpush.bf16.msra.mxu0 %v209
  %219 = vmatpush.bf16.msra.mxu0 %v208
  %220 = vmatpush.bf16.msra.mxu0 %v207
  %221 = vmatpush.bf16.msra.mxu0 %v206
  %222 = vmatpush.bf16.msra.mxu0 %v205
  %223 = vmatpush.bf16.msra.mxu0 %v204
  %224 = vmatpush.bf16.msra.mxu0 %v203
  %225 = vmatpush.bf16.msra.mxu0 %v202
  %226 = vmatmul.bf16.gmra.mxu0 %v149
  %v227 = vpop.f32.mrf.mxu0
  %v228 = vadd.f32 %v168, %v227
  %v229 = vpop.f32.mrf.mxu0
  %230 = vdwg.mxu0
  %vm231 = vcmask 64512
  %232 = vst.msk [vmem:[%s7] sm:$0xff] %vm231, %v228
  // Predicated region
  $region30: #{agent_nn_forward.1} parent=0 // pred_check
    _
  $region31: #{agent_nn_forward.1} parent=0 // pred_check_branch
    %234 = sbr.rel (0) target = $region33
  $region32: #{agent_nn_forward.1} parent=0 // pred_region
    _
  $region33: #{agent_nn_forward.1} parent=0 // pred_fallthru
    _
  // Predicated region
  $region34: #{agent_nn_forward.1} parent=0 // pred_check
    _
  $region35: #{agent_nn_forward.1} parent=0 // pred_check_branch
    %236 = sbr.rel (0) target = $region37
  $region36: #{agent_nn_forward.1} parent=0 // pred_region
    _
  $region37: #{agent_nn_forward.1} parent=0 // pred_fallthru
    _

</llo_original>
